<compile_context>
chip_gen: v7x
topology: tpu7x:2x2x1
jax: 0.10.0
libtpu: 0.0.40
codegen_flags: <defaults>
</compile_context>

<pallas_src>
import functools

import jax
import jax.numpy as jnp
from jax.experimental import pallas as pl
from jax.experimental.pallas import tpu as pltpu


def _round_up(x, m):
    return ((x + m - 1) // m) * m


def _vmem_capacity_bytes():
    """Physical VMEM of the current TPU generation (conservative fallback)."""
    try:
        return int(pltpu.get_tpu_info().vmem_capacity_bytes)
    except Exception:
        return 64 << 20  # assume v7x-sized VMEM if the query fails


def _tensorcores_per_chip():
    """Heuristic: v7x has 2 TensorCores/chip, v5e/v6e have 1."""
    try:
        kind = jax.devices()[0].device_kind.lower()
    except Exception:
        return 1
    return 2 if "v7" in kind else 1


def _layernorm_chan_kernel(x_ref, gb_ref, o_ref, *, eps, inv_c):
    # x_ref block: (1, C, T); gb_ref block: (2, C, 1) f32 (row 0 = g, row 1 = b)
    x = x_ref[...].astype(jnp.float32)
    gb = gb_ref[...]
    g = gb[0:1]                                   # (1, C, 1)
    b = gb[1:2]                                   # (1, C, 1)

    # One-pass mean / variance over channels (independent per spatial column).
    mean = jnp.sum(x, axis=1, keepdims=True) * inv_c          # (1, 1, T)
    ex2 = jnp.sum(x * x, axis=1, keepdims=True) * inv_c        # (1, 1, T)
    var = jnp.maximum(ex2 - mean * mean, 0.0)                  # clamp: cancellation guard
    inv_std = jax.lax.rsqrt(var + eps)

    scale = g * inv_std                                        # (1, C, T)
    o_ref[...] = ((x - mean) * scale + b).astype(o_ref.dtype)


def _choose_hw_tile(N, C, HW, itemsize, vmem_budget, num_cores,
                    max_hw_tile=2048):
    """Pick a lane-dense spatial tile (multiple of 128) within a VMEM budget."""
    if HW <= 128:
        # Full-extent block is always legal; single step, no masking issues.
        return HW
    HW128 = _round_up(HW, 128)

    # VMEM per lane of tile: double-buffered in+out blocks in x dtype plus ~3
    # f32 temporaries live in the kernel body (bf16 inputs upcast to f32).
    bytes_per_lane = C * (4 * itemsize + 3 * 4)
    cap = max(128, (vmem_budget // bytes_per_lane) // 128 * 128)
    cap = min(cap, max_hw_tile, HW128)

    # Megacore (v7x: 2 TCs/chip): with a degenerate batch axis make sure the
    # spatial axis provides >= num_cores parallel grid steps.  Skipped on
    # single-TC generations (it would only shrink the tile for nothing).
    if N == 1 and num_cores > 1 and HW128 >= num_cores * 128:
        cap = min(cap, max(128, (HW128 // num_cores) // 128 * 128))

    # Prefer the largest 128-multiple tile <= cap that divides the 128-rounded
    # extent: every block stays lane-dense (unmasked vst) with no padded
    # traffic and no ragged final block.
    best_div = 0
    t = cap
    while t >= 128:
        if HW128 % t == 0:
            best_div = t
            break
        t -= 128
    if best_div >= min(512, cap):
        return best_div

    # No good divisor: keep the big tile and let the final cdiv block be ragged
    # (OOB lanes read unspecified data / writes dropped; safe for per-column math).
    return cap


def layer_norm_nchw(x, g, b, eps=1e-5, hw_tile=None):
    """Channel LayerNorm on an NCHW tensor via a Pallas TPU kernel."""
    N, C, H, W = x.shape
    HW = H * W
    itemsize = jnp.dtype(x.dtype).itemsize

    # Generation-aware VMEM budgeting: tight on v7x (64 MiB physical), relaxed
    # on v5e/v6e (128 MiB physical) so large-C tiles stay >= 512 lanes.
    vmem_cap = _vmem_capacity_bytes()
    if vmem_cap >= (128 << 20):
        vmem_budget, vmem_clamp = 80 << 20, 96 << 20
    else:
        vmem_budget, vmem_clamp = 36 << 20, 48 << 20

    num_cores = _tensorcores_per_chip()

    if hw_tile is None:
        hw_tile = _choose_hw_tile(N, C, HW, itemsize, vmem_budget, num_cores)
    else:
        # Sanitize a user-provided tile: multiple of 128 (or full extent).
        if HW > 128:
            hw_tile = max(128, (min(hw_tile, _round_up(HW, 128)) // 128) * 128)
        else:
            hw_tile = HW

    x2 = x.reshape(N, C, HW)                      # free (contiguous view)
    gb = jnp.concatenate(
        [jnp.asarray(g, jnp.float32).reshape(1, C, 1),
         jnp.asarray(b, jnp.float32).reshape(1, C, 1)], axis=0)   # (2, C, 1)

    grid = (N, pl.cdiv(HW, hw_tile))

    # Explicit scoped-VMEM request: double-buffered in/out blocks in x dtype
    # plus ~3 f32 temporaries, clamped per generation.
    block_bytes = C * hw_tile * itemsize
    vmem_need = 4 * block_bytes + 3 * C * hw_tile * 4 + (1 << 20)
    vmem_limit = int(min(max(vmem_need, 16 << 20), vmem_clamp))

    cost = pl.CostEstimate(
        flops=6 * N * C * HW,
        transcendentals=N * HW,
        bytes_accessed=2 * N * C * HW * itemsize + 2 * C * 4,
    )

    out = pl.pallas_call(
        functools.partial(_layernorm_chan_kernel, eps=eps, inv_c=1.0 / C),
        out_shape=jax.ShapeDtypeStruct((N, C, HW), x.dtype),
        grid=grid,
        in_specs=[
            pl.BlockSpec((1, C, hw_tile), lambda n, s: (n, 0, s)),
            pl.BlockSpec((2, C, 1), lambda n, s: (0, 0, 0)),
        ],
        out_specs=pl.BlockSpec((1, C, hw_tile), lambda n, s: (n, 0, s)),
        compiler_params=pltpu.CompilerParams(
            dimension_semantics=("parallel", "parallel"),
            vmem_limit_bytes=vmem_limit,
        ),
        cost_estimate=cost,
    )(x2, gb)

    return out.reshape(N, C, H, W)


class PreNorm:
    """JAX/Pallas port of PreNorm: x -> fn(LayerNorm(dim)(x)).

    `fn` is an arbitrary callable (injected at construction time, as in the
    PyTorch module); the normalization hot path runs in the Pallas kernel.
    """

    def __init__(self, dim, fn, eps=1e-5):
        self.fn = fn
        self.eps = eps
        self.dim = dim
        # Matches nn.Parameter(torch.ones/zeros(1, dim, 1, 1)).
        self.g = jnp.ones((1, dim, 1, 1), jnp.float32)
        self.b = jnp.zeros((1, dim, 1, 1), jnp.float32)

    def __call__(self, x):
        # g/b are read at call time (no stale snapshot if parameters change).
        x = layer_norm_nchw(x, self.g, self.b, self.eps)
        return self.fn(x)


def _reference_layernorm(x, g, b, eps=1e-5):
    mean = jnp.mean(x, axis=1, keepdims=True)
    var = jnp.mean((x - mean) ** 2, axis=1, keepdims=True)
    return (x - mean) / jnp.sqrt(var + eps) * g + b


if __name__ == "__main__":
    key = jax.random.PRNGKey(0)

    # Demo shape consistent with the module (NCHW).
    N, C, H, W = 2, 4, 16, 16
    x = jax.random.normal(key, (N, C, H, W), dtype=jnp.float32)

    # fn is user-supplied in the PyTorch module; identity here so the demo's
    # semantics are exactly the LayerNorm wrapped by PreNorm.
    prenorm = PreNorm(C, fn=lambda y: y)
    out = jax.block_until_ready(prenorm(x))
    ref = _reference_layernorm(x, prenorm.g, prenorm.b, prenorm.eps)
    assert out.shape == (N, C, H, W)
    assert jnp.allclose(out, ref, atol=1e-4, rtol=1e-4), "mismatch vs reference"

    # Second check exercising the ragged (cdiv) spatial path and N==1.
    N2, C2, H2, W2 = 1, 8, 17, 17
    x2 = jax.random.normal(jax.random.PRNGKey(1), (N2, C2, H2, W2), jnp.float32)
    prenorm2 = PreNorm(C2, fn=lambda y: y)
    out2 = jax.block_until_ready(prenorm2(x2))
    ref2 = _reference_layernorm(x2, prenorm2.g, prenorm2.b, prenorm2.eps)
    assert out2.shape == (N2, C2, H2, W2)
    assert jnp.allclose(out2, ref2, atol=1e-4, rtol=1e-4), "mismatch (ragged path)"

    print("KERNEL_OK")
</pallas_src>

<mosaic_0001>
module attributes {stable_mosaic.version = 11 : i64} {
  func.func @_layernorm_chan_kernel(%arg0: i32, %arg1: i32, %arg2: memref<1x4x256xf32, #tpu.memory_space<vmem>>, %arg3: memref<2x4x1xf32, #tpu.memory_space<vmem>>, %arg4: memref<1x4x256xf32, #tpu.memory_space<vmem>>) attributes {dimension_semantics = [#tpu.dimension_semantics<parallel>, #tpu.dimension_semantics<parallel>], iteration_bounds = array<i64: 2, 1>, scalar_prefetch = 0 : i64, scratch_operands = 0 : i64, tpu.core_type = #tpu.core_type<tc>, window_params = [{transform_indices = @transform_0, window_bounds = array<i64: 1, 4, 256>}, {pipeline_mode = #tpu.pipeline_mode<synchronous>, transform_indices = @transform_1, window_bounds = array<i64: 2, 4, 1>}, {transform_indices = @transform_2, window_bounds = array<i64: 1, 4, 256>}]} {
    %c0 = arith.constant 0 : index
    %c0_0 = arith.constant 0 : index
    %c0_1 = arith.constant 0 : index
    %0 = vector.load %arg2[%c0, %c0_0, %c0_1] : memref<1x4x256xf32, #tpu.memory_space<vmem>>, vector<1x4x256xf32>
    %c0_2 = arith.constant 0 : index
    %c0_3 = arith.constant 0 : index
    %c0_4 = arith.constant 0 : index
    %1 = vector.load %arg3[%c0_2, %c0_3, %c0_4] : memref<2x4x1xf32, #tpu.memory_space<vmem>>, vector<2x4x1xf32>
    %2 = vector.extract_strided_slice %1 {offsets = [0, 0, 0], sizes = [1, 4, 1], strides = [1, 1, 1]} : vector<2x4x1xf32> to vector<1x4x1xf32>
    %3 = vector.extract_strided_slice %1 {offsets = [1, 0, 0], sizes = [1, 4, 1], strides = [1, 1, 1]} : vector<2x4x1xf32> to vector<1x4x1xf32>
    %cst = arith.constant dense<0.000000e+00> : vector<1x256xf32>
    %4 = vector.multi_reduction <add>, %0, %cst [1] : vector<1x4x256xf32> to vector<1x256xf32>
    %5 = vector.shape_cast %4 : vector<1x256xf32> to vector<1x1x256xf32>
    %cst_5 = arith.constant 2.500000e-01 : f32
    %6 = vector.broadcast %cst_5 : f32 to vector<1x1x256xf32>
    %7 = arith.mulf %5, %6 : vector<1x1x256xf32>
    %8 = arith.mulf %0, %0 : vector<1x4x256xf32>
    %cst_6 = arith.constant dense<0.000000e+00> : vector<1x256xf32>
    %9 = vector.multi_reduction <add>, %8, %cst_6 [1] : vector<1x4x256xf32> to vector<1x256xf32>
    %10 = vector.shape_cast %9 : vector<1x256xf32> to vector<1x1x256xf32>
    %cst_7 = arith.constant 2.500000e-01 : f32
    %11 = vector.broadcast %cst_7 : f32 to vector<1x1x256xf32>
    %12 = arith.mulf %10, %11 : vector<1x1x256xf32>
    %13 = arith.mulf %7, %7 : vector<1x1x256xf32>
    %14 = arith.subf %12, %13 : vector<1x1x256xf32>
    %cst_8 = arith.constant 0.000000e+00 : f32
    %15 = vector.broadcast %cst_8 : f32 to vector<1x1x256xf32>
    %16 = arith.maximumf %14, %15 : vector<1x1x256xf32>
    %cst_9 = arith.constant 9.99999974E-6 : f32
    %17 = vector.broadcast %cst_9 : f32 to vector<1x1x256xf32>
    %18 = arith.addf %16, %17 : vector<1x1x256xf32>
    %19 = math.rsqrt %18 : vector<1x1x256xf32>
    %20 = vector.broadcast %2 : vector<1x4x1xf32> to vector<1x4x256xf32>
    %21 = vector.broadcast %19 : vector<1x1x256xf32> to vector<1x4x256xf32>
    %22 = arith.mulf %20, %21 : vector<1x4x256xf32>
    %23 = vector.broadcast %7 : vector<1x1x256xf32> to vector<1x4x256xf32>
    %24 = arith.subf %0, %23 : vector<1x4x256xf32>
    %25 = arith.mulf %24, %22 : vector<1x4x256xf32>
    %26 = vector.broadcast %3 : vector<1x4x1xf32> to vector<1x4x256xf32>
    %27 = arith.addf %25, %26 : vector<1x4x256xf32>
    %c0_10 = arith.constant 0 : index
    %c0_11 = arith.constant 0 : index
    %c0_12 = arith.constant 0 : index
    %28 = vector.load %arg4[%c0_10, %c0_11, %c0_12] : memref<1x4x256xf32, #tpu.memory_space<vmem>>, vector<1x4x256xf32>
    tpu.vector_store %arg4[%c0_10, %c0_11, %c0_12], %27 {strides = array<i32>} : memref<1x4x256xf32, #tpu.memory_space<vmem>>, vector<1x4x256xf32>,
    return
  }
  func.func @transform_0(%arg0: i32, %arg1: i32) -> (i32, i32, i32) {
    %c0_i32 = arith.constant 0 : i32
    %c0_i32_0 = arith.constant 0 : i32
    return %arg0, %c0_i32, %arg1 : i32, i32, i32
  }
  func.func @transform_1(%arg0: i32, %arg1: i32) -> (i32, i32, i32) {
    %c0_i32 = arith.constant 0 : i32
    %c0_i32_0 = arith.constant 0 : i32
    %c0_i32_1 = arith.constant 0 : i32
    %c0_i32_2 = arith.constant 0 : i32
    return %c0_i32, %c0_i32_0, %c0_i32_1 : i32, i32, i32
  }
  func.func @transform_2(%arg0: i32, %arg1: i32) -> (i32, i32, i32) {
    %c0_i32 = arith.constant 0 : i32
    %c0_i32_0 = arith.constant 0 : i32
    return %arg0, %c0_i32, %arg1 : i32, i32, i32
  }
}

</mosaic_0001>

<llo_original>
// kernel: tpu_custom_call.1
$region0: #{tpu_custom_call.1}
  #allocation0 [shape = 'u32[]', space=smem, size = 0x4, offset = 0x4, fixed_abs, tag = 'smem constant byte address 0x4 - core index']
  #allocation1 [shape = 'u32[144,128]{1,0:T(1,128)}', space=vmem, size = 0x12000, scoped, tag = 'internal scratch']
  %s0 = inlined_call_operand.hbm [shape: f32[2,4,256], index: 0, kind: input, shape index: {}]
  %s1 = inlined_call_operand.vmem [shape: f32[2,4,1], index: 1, kind: input, shape index: {}]
  %s2 = inlined_call_operand.hbm [shape: f32[2,4,256], index: 2, kind: output, shape index: {}]
  %s3 = sld [smem:[#allocation0]]
  $region45: #{tpu_custom_call.1} parent=0
    _
  %s5 = ssub.s32 1, %s3
  %s6 = scalar_select 0, %s5, %s3
  $region1: #{tpu_custom_call.1} parent=0
    #allocation2 [shape = 'u8[8192]{0}', space=vmem, size = 0x2000, scoped, tag = 'input window, operand 0']
    #allocation3 [shape = 's32[2]{0}', space=sflag, size = 0x8, scoped, tag = 'scoped memory for tpu_custom_call.1']
    #allocation4 [shape = 's32[2]{0}', space=sflag, size = 0x8, scoped, tag = 'scoped memory for tpu_custom_call.1']
    #allocation5 [shape = 'u8[8192]{0}', space=vmem, size = 0x2000, scoped, tag = 'output window, operand 0']
    %7 = vsyncpa [#allocation3], 0
    %s8 = scalar_lea.sflag [#allocation3], 1
    %9 = vsyncpa %s8, 0
    %10 = vsyncpa [#allocation4], 0
    %s11 = scalar_lea.sflag [#allocation4], 1
    %12 = vsyncpa %s11, 0
    loop: start=0, step=1, limit=4
    $region2: #{tpu_custom_call.1} parent=1 // loop_pre_header
      _
    $region3: #{tpu_custom_call.1} parent=1 // loop_header
      %s14 = sphi 0, %s18
      %p15 = scmp.ge.s32.totalorder %s14, 4
      %s21 = sphi 0, %s33
      %s22 = sphi 0, %s29
      %s23 = sphi 0, %s21
      %s24 = sphi 0, %s22
      %s25 = sphi 0, %s23
      %s26 = sphi 0, %s24
      %s38 = sphi 0, %s40
      %s41 = sphi 0, %s38
      %s42 = sphi 0, %s41
      %s58 = sphi 0, %s42
      %s62 = sphi 0, %s62
      %s64 = sphi 0, %s62
      %s65 = sphi 0, %s64
      %s79 = sphi 0, %s65
      %s87 = sphi 0, %s89
      %s90 = sphi 0, %s87
      %s91 = sphi 0, %s90
      %s107 = sphi 0, %s91
    $region4: #{tpu_custom_call.1} parent=1 // loop_header_branch
      %17 = sbr.rel (%p15) target = $region8
    $region5: #{tpu_custom_call.1} parent=1 // loop_body
      %s19 = ssub.s32 %s14, 1
      %s20 = ssub.s32 %s14, 2
      %s27 = sadd.s32 1, %s22
      %p28 = scmp.ge.s32.totalorder %s27, 1
      %s29 = scalar_select %p28, 0, %s27
      %s30 = sadd.s32 1, %s21
      %s31 = scalar_select %p28, %s30, %s21
      %p32 = scmp.ge.s32.totalorder %s31, 2
      %s33 = scalar_select %p32, 0, %s31
      %s34 = ssub.s32 %s21, %s33
      %s35 = ssub.s32 %s22, %s29
      %s36 = sor.u32 %s34, %s35
      %p37 = scmp.eq.s32.totalorder %s36, 0
      %s39 = sadd.s32 %s38, 1
      %s40 = scalar_select %p37, %s38, %s39
      %p43 = pneg %p37
      %p44 = scmp.eq.s32.totalorder %s14, 1
      %p45 = por %p43, %p44
      %p46 = scmp.ne.s32.totalorder %s38, %s41
      %p47 = scmp.eq.s32.totalorder %s14, 0
      %p48 = por %p46, %p47
      %p49 = scmp.ne.s32.totalorder %s38, %s41
      %p50 = scmp.eq.s32.totalorder %s19, 1
      %p51 = por %p49, %p50
      %p52 = scmp.ne.s32.totalorder %s41, %s42
      %p53 = scmp.eq.s32.totalorder %s19, 0
      %p54 = por %p52, %p53
      %p55 = scmp.ne.s32.totalorder %s41, %s42
      %p56 = scmp.eq.s32.totalorder %s20, 1
      %p57 = por %p55, %p56
      %p59 = scmp.ne.s32.totalorder %s42, %s58
      %p60 = scmp.eq.s32.totalorder %s20, 0
      %p61 = por %p59, %p60
      %s63 = sadd.s32 %s62, 1
      %p66 = scmp.eq.s32.totalorder %s14, 1
      %p67 = scmp.ne.s32.totalorder %s62, %s64
      %p68 = scmp.eq.s32.totalorder %s14, 0
      %p69 = por %p67, %p68
      %p70 = scmp.ne.s32.totalorder %s62, %s64
      %p71 = scmp.eq.s32.totalorder %s19, 1
      %p72 = por %p70, %p71
      %p73 = scmp.ne.s32.totalorder %s64, %s65
      %p74 = scmp.eq.s32.totalorder %s19, 0
      %p75 = por %p73, %p74
      %p76 = scmp.ne.s32.totalorder %s64, %s65
      %p77 = scmp.eq.s32.totalorder %s20, 1
      %p78 = por %p76, %p77
      %p80 = scmp.ne.s32.totalorder %s65, %s79
      %p81 = scmp.eq.s32.totalorder %s20, 0
      %p82 = por %p80, %p81
      %s83 = ssub.s32 %s21, %s33
      %s84 = ssub.s32 %s22, %s29
      %s85 = sor.u32 %s83, %s84
      %p86 = scmp.eq.s32.totalorder %s85, 0
      %s88 = sadd.s32 %s87, 1
      %s89 = scalar_select %p86, %s87, %s88
      %p92 = pneg %p86
      %p93 = scmp.eq.s32.totalorder %s14, 1
      %p94 = por %p92, %p93
      %p95 = scmp.ne.s32.totalorder %s87, %s90
      %p96 = scmp.eq.s32.totalorder %s14, 0
      %p97 = por %p95, %p96
      %p98 = scmp.ne.s32.totalorder %s87, %s90
      %p99 = scmp.eq.s32.totalorder %s19, 1
      %p100 = por %p98, %p99
      %p101 = scmp.ne.s32.totalorder %s90, %s91
      %p102 = scmp.eq.s32.totalorder %s19, 0
      %p103 = por %p101, %p102
      %p104 = scmp.ne.s32.totalorder %s90, %s91
      %p105 = scmp.eq.s32.totalorder %s20, 1
      %p106 = por %p104, %p105
      %p108 = scmp.ne.s32.totalorder %s91, %s107
      %p109 = scmp.eq.s32.totalorder %s20, 0
      %p110 = por %p108, %p109
      %p111 = scmp.le.s32.totalorder 1, %s14
      %p112 = scmp.lt.s32.totalorder %s14, 3
      %p113 = pnand %p111, %p112
      %p114 = pneg %p113
      // Predicated region
      $region9: #{tpu_custom_call.1} parent=5 // pred_check
        _
      $region10: #{tpu_custom_call.1} parent=5 // pred_check_branch
        %116 = sbr.rel (%p113) target = $region12
      $region11: #{tpu_custom_call.1} parent=5 // pred_region
        %s117 = ssub.s32 %s14, 1
        // Predicated region
        $region13: #{tpu_custom_call.1} parent=11 // pred_check
          %p118 = pneg %p75
        $region14: #{tpu_custom_call.1} parent=11 // pred_check_branch
          %120 = sbr.rel (%p118) target = $region16
        $region15: #{tpu_custom_call.1} parent=11 // pred_region
          _
        $region16: #{tpu_custom_call.1} parent=11 // pred_fallthru
          _
      $region12: #{tpu_custom_call.1} parent=5 // pred_fallthru
        _
      %p121 = scmp.lt.s32.totalorder %s14, 2
      // Predicated region
      $region17: #{tpu_custom_call.1} parent=5 // pred_check
        %p122 = pneg %p121
      $region18: #{tpu_custom_call.1} parent=5 // pred_check_branch
        %124 = sbr.rel (%p122) target = $region20
      $region19: #{tpu_custom_call.1} parent=5 // pred_region
        // Predicated region
        $region21: #{tpu_custom_call.1} parent=19 // pred_check
          %p125 = pneg %p48
        $region22: #{tpu_custom_call.1} parent=19 // pred_check_branch
          %127 = sbr.rel (%p125) target = $region24
        $region23: #{tpu_custom_call.1} parent=19 // pred_region
          %s128 = sand.u32 %s38, 1
          %s129 = scalar_lea.sflag [#allocation3], %s128
          %s130 = sand.u32 %s38, 1
          %s131 = smul.addr %s130, 8
          %s132 = scalar_lea.vmem [#allocation2], %s131
          %s133 = smul.u32 2, %s22
          %s135 = ssub.s32 128, 128
          %136 = vsyncadd %s129, %s135
          %s137 = smul.addr %s21, 2
          %s138 = sadd.s32 %s133, %s137
          %s139 = smul.addr %s138, 64
          %s140 = scalar_lea.hbm %s0, %s139
          %s142 = sshll.u32 %s132, 4
          %s143 = int_to_ptr.vmem [resolvable:$true] %s142
          %145 = dma.hbm_to_vmem [thread:$0]  %s140, 128, %s143, %s129
        $region24: #{tpu_custom_call.1} parent=19 // pred_fallthru
          _
      $region20: #{tpu_custom_call.1} parent=5 // pred_fallthru
        _
      %p146 = scmp.le.s32.totalorder 1, %s14
      %p147 = scmp.lt.s32.totalorder %s14, 3
      %p148 = pnand %p146, %p147
      %p149 = pneg %p148
      // Predicated region
      $region25: #{tpu_custom_call.1} parent=5 // pred_check
        _
      $region26: #{tpu_custom_call.1} parent=5 // pred_check_branch
        %151 = sbr.rel (%p148) target = $region28
      $region27: #{tpu_custom_call.1} parent=5 // pred_region
        %s152 = ssub.s32 %s14, 1
        %s153 = sand.u32 %s41, 1
        %s154 = scalar_lea.sflag [#allocation3], %s153
        %s155 = sand.u32 %s41, 1
        %s156 = smul.addr %s155, 8
        %s157 = scalar_lea.vmem [#allocation2], %s156
        // Predicated region
        $region29: #{tpu_custom_call.1} parent=27 // pred_check
          %p158 = pneg %p54
        $region30: #{tpu_custom_call.1} parent=27 // pred_check_branch
          %160 = sbr.rel (%p158) target = $region32
        $region31: #{tpu_custom_call.1} parent=27 // pred_region
          %161 = dma.done %s154, 128
        $region32: #{tpu_custom_call.1} parent=27 // pred_fallthru
          _
        %s162 = sand.u32 %s41, 1
        %s163 = scalar_lea.sflag [#allocation3], %s162
        %s164 = sand.u32 %s41, 1
        %s165 = smul.addr %s164, 8
        %s166 = scalar_lea.vmem [#allocation2], %s165
        %p167 = pneg %p54
        %p168 = pneg %p51
        %p169 = pneg %p75
        %p170 = pneg %p72
        %p171 = pneg %p103
        %p172 = pneg %p100
        %s173 = sand.u32 %s90, 1
        %s174 = scalar_lea.sflag [#allocation4], %s173
        %s175 = sand.u32 %s90, 1
        %s176 = smul.addr %s175, 8
        %s177 = scalar_lea.vmem [#allocation5], %s176
        %s178 = smul.u32 2, %s24
        %s179 = smul.u32 2, %s24
        %v180 = vld [vmem:[%s157] sm:$0xff]
        %v181 = vld [vmem:[%s1] sm:$0xf]
        %v182 = vld [vmem:[%s1 + $0x4] sm:$0xf]
        %v184 = vcombine.high %v180, %v180
        %vm186 = vcmask 1043456
        %v187 = vsel %vm186, %v180, 0.0
        %v188 = vrot.slane %v187, 4
        %v189 = vadd.f32 %v187, %v188
        %v190 = vrot.slane %v189, 2
        %v191 = vadd.f32 %v189, %v190
        %v192 = vrot.slane %v191, 1
        %v193 = vadd.f32 %v191, %v192
        %v194 = vsel %vm186, %v184, 0.0
        %v195 = vrot.slane %v194, 4
        %v196 = vadd.f32 %v194, %v195
        %v197 = vrot.slane %v196, 2
        %v198 = vadd.f32 %v196, %v197
        %v199 = vrot.slane %v198, 1
        %v200 = vadd.f32 %v198, %v199
        %v201 = vmul.f32 %v193, 0.25
        %v202 = vmul.f32 %v200, 0.25
        %v203 = vmul.f32 %v180, %v180
        %v205 = vcombine.high %v203, %v203
        %v207 = vsel %vm186, %v203, 0.0
        %v208 = vrot.slane %v207, 4
        %v209 = vadd.f32 %v207, %v208
        %v210 = vrot.slane %v209, 2
        %v211 = vadd.f32 %v209, %v210
        %v212 = vrot.slane %v211, 1
        %v213 = vadd.f32 %v211, %v212
        %v214 = vsel %vm186, %v205, 0.0
        %v215 = vrot.slane %v214, 4
        %v216 = vadd.f32 %v214, %v215
        %v217 = vrot.slane %v216, 2
        %v218 = vadd.f32 %v216, %v217
        %v219 = vrot.slane %v218, 1
        %v220 = vadd.f32 %v218, %v219
        %v221 = vmul.f32 %v213, 0.25
        %v222 = vmul.f32 %v220, 0.25
        %v223 = vmul.f32 %v201, %v201
        %v224 = vmul.f32 %v202, %v202
        %v225 = vsub.f32 %v221, %v223
        %v226 = vsub.f32 %v222, %v224
        %v227 = vmax.f32 %v225, 0.0
        %v228 = vmax.f32 %v226, 0.0
        %v229 = vadd.f32 %v227, 1e-05
        %v230 = vadd.f32 %v228, 1e-05
        %v231 = vrsqrt.pop %v229
        %v232 = vrsqrt.pop %v230
        %234 = vset.pattern.permute.xlu0 0
        %235 = vperm.xlu0 %234, %v181
        %v236 = vpop.permute.xlu0 %235
        %v238 = vmul.f32 %v236, %v231
        %v239 = vmul.f32 %v236, %v232
        %v242 = vcombine.low %v201, %v202
        %v244 = vsub.f32 %v180, %v242
        %v247 = vcombine.low %v238, %v239
        %v249 = vmul.f32 %v244, %v247
        %251 = vset.pattern.permute.xlu0 0
        %252 = vperm.xlu0 %251, %v182
        %v253 = vpop.permute.xlu0 %252
        %v255 = vunpack.c.l.s4 839922192
        %v256 = vunpack.c.0.s8 %v255
        %v257 = vlaneseq
        %v258 = vshrl.u32 %v257, 7
        %v259 = vsub.s32 %v256, %v258
        %v260 = vrot.slane %v253, %v259
        %v262 = vadd.f32 %v249, %v260
        %263 = vst [vmem:[%s177] sm:$0xff] %v262
        %s264 = sand.u32 %s90, 1
        %s265 = scalar_lea.sflag [#allocation4], %s264
        %s266 = sand.u32 %s90, 1
        %s267 = smul.addr %s266, 8
        %s268 = scalar_lea.vmem [#allocation5], %s267
        // Predicated region
        $region33: #{tpu_custom_call.1} parent=27 // pred_check
          %p269 = pneg %p100
        $region34: #{tpu_custom_call.1} parent=27 // pred_check_branch
          %271 = sbr.rel (%p269) target = $region36
        $region35: #{tpu_custom_call.1} parent=27 // pred_region
          %s272 = smul.u32 2, %s24
          %s274 = ssub.s32 128, 128
          %275 = vsyncadd %s265, %s274
          %s276 = smul.addr %s23, 2
          %s277 = sadd.s32 %s272, %s276
          %s278 = smul.addr %s277, 64
          %s279 = scalar_lea.hbm %s2, %s278
          %s281 = sshll.u32 %s268, 4
          %s282 = int_to_ptr.vmem [resolvable:$true] %s281
          %284 = dma.vmem_to_hbm [thread:$0]  %s282, 128, %s279, %s265
        $region36: #{tpu_custom_call.1} parent=27 // pred_fallthru
          _
      $region28: #{tpu_custom_call.1} parent=5 // pred_fallthru
        _
      %p285 = scmp.le.s32.totalorder 2, %s14
      // Predicated region
      $region37: #{tpu_custom_call.1} parent=5 // pred_check
        %p286 = pneg %p285
      $region38: #{tpu_custom_call.1} parent=5 // pred_check_branch
        %288 = sbr.rel (%p286) target = $region40
      $region39: #{tpu_custom_call.1} parent=5 // pred_region
        %s289 = ssub.s32 %s14, 2
        // Predicated region
        $region41: #{tpu_custom_call.1} parent=39 // pred_check
          %p290 = pneg %p106
        $region42: #{tpu_custom_call.1} parent=39 // pred_check_branch
          %292 = sbr.rel (%p290) target = $region44
        $region43: #{tpu_custom_call.1} parent=39 // pred_region
          %s293 = sand.u32 %s91, 1
          %s294 = scalar_lea.sflag [#allocation4], %s293
          %s295 = sand.u32 %s91, 1
          %s296 = smul.addr %s295, 8
          %s297 = scalar_lea.vmem [#allocation5], %s296
          %298 = dma.done %s294, 128
        $region44: #{tpu_custom_call.1} parent=39 // pred_fallthru
          _
      $region40: #{tpu_custom_call.1} parent=5 // pred_fallthru
        _
    $region6: #{tpu_custom_call.1} parent=1 // loop_footer
      %s18 = sadd.s32 1, %s14
    $region7: #{tpu_custom_call.1} parent=1 // loop_footer_branch
      %13 = sbr.rel target = $region3
    $region8: #{tpu_custom_call.1} parent=1 // loop_exit
      _
    %299 = vsyncpa [#allocation3], 1
    %s300 = scalar_lea.sflag [#allocation3], 1
    %301 = vsyncpa %s300, 1
    %302 = vsyncpa [#allocation4], 1
    %s303 = scalar_lea.sflag [#allocation4], 1
    %304 = vsyncpa %s303, 1

</llo_original>
